<compile_context>
chip_gen: v7x
topology: tpu7x:2x2x1
jax: 0.10.0
libtpu: 0.0.40
codegen_flags: <defaults>
</compile_context>

<pallas_src>
import jax
import jax.numpy as jnp
from jax.experimental import pallas as pl
from jax.experimental.pallas import tpu as pltpu


def _cdiv(a, b):
    return (a + b - 1) // b


def _round_up(x, m):
    return _cdiv(x, m) * m


def _vmem_budget_and_limit():
    """Per-generation VMEM budget for the double-buffered blocks (+ scoped limit)."""
    cap = 128 << 20                       # v5e / v6e physical VMEM per TensorCore
    try:
        info = pltpu.get_tpu_info()
        cap = int(getattr(info, "vmem_capacity_bytes", cap))
    except Exception:
        pass                              # unknown platform -> conservative default
    budget = min(cap // 3, 24 << 20)      # ~21 MiB on v7x (64 MiB VMEM), 24 MiB on v5e/v6e
    limit = min(cap // 2, budget + (8 << 20))
    return budget, int(limit)


def _pick_tiles(M, D, itemsize, budget):
    """Choose rows per grid block (tm) and rows per in-kernel compute chunk (tc)."""
    # Chunk rows: keep one chunk's f32 working set (tc * D * 4 B) <= ~64 KiB so the
    # unrolled chunk bodies stay friendly to the 64-vreg file (no spill traffic).
    tc = 8
    while tc < 512 and (2 * tc) * D * 4 <= (64 << 10):
        tc *= 2
    unit = max(tc, 128)                   # lane-dense out block needs tm % 128 == 0
    # Per-row VMEM: double-buffered (tm, D) input block + double-buffered (1, tm)
    # output block (sublane dim padded 1 -> 8).
    per_row = 2 * D * itemsize + 2 * 8 * 4
    tm = max(unit, (budget // per_row) // unit * unit)
    tm = min(tm, 32 * tc, 4096)           # bound unroll depth and per-step block size
    if M > unit:
        # Keep >= 2 grid blocks when there is enough work: lets the pipeline overlap
        # DMA and compute, and lets v7x megacore shard the "parallel" axis.
        tm = min(tm, _round_up(_cdiv(M, 2), unit))
    if tm >= M:
        return M, tc                      # single block covering all rows exactly
    return tm, tc


def _make_kernel(tm, tc):
    """o[0, r] = sum_d x[r, d] * w[0, d] for a (tm, D) row block, chunked over rows."""
    chunks = []
    r0 = 0
    while r0 < tm:                        # static chunk schedule (<= 33 chunks)
        sz = min(tc, tm - r0)
        chunks.append((r0, sz))
        r0 += sz

    def kernel(x_ref, w_ref, o_ref):
        # x_ref: (tm, D); w_ref: (1, D); o_ref: (1, tm) float32, lane-dense.
        w = w_ref[...].astype(jnp.float32)          # hoisted out of the chunk loop
        for c0, sz in chunks:                       # static unroll, static offsets
            x = x_ref[pl.ds(c0, sz), :].astype(jnp.float32)       # (sz, D)
            # (1, D) x (sz, D) contracting the shared minor dim -> (1, sz).
            # Same dimension-number pattern as q @ k^T; the result is lane-major,
            # so the store below is an unmasked lane-dense write.
            row = jax.lax.dot_general(
                w, x, (((1,), (1,)), ((), ())),
                precision=jax.lax.Precision.HIGHEST,
                preferred_element_type=jnp.float32)               # (1, sz)
            o_ref[:, pl.ds(c0, sz)] = row

    return kernel


def _t4_rowdot(x2d, w2d):
    """x2d: [M, Dfull]; w2d: [1, D] with D == Dfull or D dividing Dfull.

    Returns [1, Mpad] float32 with out[0, m] = sum_{d < D} x2d[m, d] * w2d[0, d]
    (i.e. only column-block 0 of x2d is read when D < Dfull).
    """
    M, _ = x2d.shape
    D = w2d.shape[1]
    itemsize = jnp.dtype(x2d.dtype).itemsize
    budget, vmem_limit = _vmem_budget_and_limit()
    tm, tc = _pick_tiles(M, D, itemsize, budget)
    nblocks = _cdiv(M, tm)
    mpad = nblocks * tm

    return pl.pallas_call(
        _make_kernel(tm, tc),
        out_shape=jax.ShapeDtypeStruct((1, mpad), jnp.float32),
        grid_spec=pltpu.PrefetchScalarGridSpec(
            num_scalar_prefetch=0,
            grid=(nblocks,),
            in_specs=[
                # Only column-block 0 is DMA'd (the K=0 slice on the fused path).
                pl.BlockSpec((tm, D), lambda i: (i, 0)),
                pl.BlockSpec((1, D), lambda i: (0, 0)),    # weight, resident
            ],
            out_specs=pl.BlockSpec((1, tm), lambda i: (0, i)),
        ),
        compiler_params=pltpu.CompilerParams(
            dimension_semantics=("parallel",),   # independent row blocks (v7x megacore)
            vmem_limit_bytes=vmem_limit,
        ),
        cost_estimate=pl.CostEstimate(
            flops=2 * M * D,
            transcendentals=0,
            bytes_accessed=M * D * itemsize + mpad * 4 + D * itemsize,
        ),
    )(x2d, w2d)


def t4_linear(states, weight):
    """states: [B, S, K, H]; weight: [1, H] or [H] (nn.Linear(H, 1, bias=False).weight).

    Returns [B, S] with out[b, s] = sum_h states[b, s, 0, h] * weight[h].
    """
    B, S, K, H = states.shape
    M = B * S
    # Merging (B,S) and (K,H) keeps row-major contiguity -> free reshape (no copy).
    x2d = states.reshape(M, K * H)
    w_row = weight.reshape(1, H)

    # Static path selection, decided purely from shapes (no try/except under jit).
    if K == 1 or H % 128 == 0:
        # Legal (tm, H) sub-block at column-block 0 of [M, K*H]: only the K=0 slice
        # is read from HBM (K x less traffic).
        w2d = w_row
    else:
        # Fallback: read full rows, fold the K=0 selection into a zero-padded weight.
        w2d = jnp.zeros((1, K * H), w_row.dtype).at[0, :H].set(w_row[0])

    out = _t4_rowdot(x2d, w2d)                      # (1, Mpad) float32
    return out[0, :M].reshape(B, S).astype(states.dtype)


def t4_forward(context, query, common_output, linear_weight):
    """Mirrors T4.forward (the embedding / t4_encoder members are unused there)."""
    states = common_output['query_context_states'][-1]      # [B, S, K, H]
    t4_output = t4_linear(states, linear_weight)             # [B, S]
    common_output = dict(common_output)
    common_output['t4_output'] = t4_output
    return common_output


if __name__ == "__main__":
    # Shapes consistent with the forward: batch=2, seq=8, K (indexed by 0) = 4,
    # hidden=32, num_layers=3.
    B, S, K, H, L = 2, 8, 4, 32, 3

    key = jax.random.PRNGKey(0)
    k_states, k_w = jax.random.split(key)

    query_context_states = [
        jax.random.normal(jax.random.fold_in(k_states, l), (B, S, K, H), dtype=jnp.float32)
        for l in range(L)
    ]
    linear_weight = jax.random.normal(k_w, (1, H), dtype=jnp.float32) * 0.1

    # Tolerance allows for MXU f32 multi-pass rounding; real logic bugs (e.g. a wrong
    # K slice) produce O(1) errors and are still caught.
    TOL = 1e-3

    common_output = {'query_context_states': query_context_states}
    result = t4_forward(None, None, common_output, linear_weight)
    t4_output = jax.block_until_ready(result['t4_output'])
    ref = jnp.sum(query_context_states[-1][:, :, 0, :] * linear_weight[0], axis=-1)
    assert t4_output.shape == (B, S)
    assert jnp.allclose(t4_output, ref, atol=TOL, rtol=TOL)

    # Case 2: B*S not a multiple of the tile -> multi-block grid, unrolled chunk loop,
    # edge-block masking (fallback full-row path since H=32 is not a lane multiple).
    B2, S2 = 4, 400
    states2 = jax.random.normal(
        jax.random.fold_in(k_states, 123), (B2, S2, K, H), dtype=jnp.float32)
    out2 = t4_forward(None, None, {'query_context_states': [states2]},
                      linear_weight)['t4_output']
    out2 = jax.block_until_ready(out2)
    ref2 = jnp.sum(states2[:, :, 0, :] * linear_weight[0], axis=-1)
    assert out2.shape == (B2, S2)
    assert jnp.allclose(out2, ref2, atol=TOL, rtol=TOL)

    # Case 3: H a multiple of 128 -> exercises the K=0-column-only (sliced) DMA path.
    H3 = 128
    states3 = jax.random.normal(
        jax.random.fold_in(k_states, 7), (2, 300, K, H3), dtype=jnp.float32)
    w3 = jax.random.normal(jax.random.fold_in(k_w, 1), (1, H3), dtype=jnp.float32) * 0.05
    out3 = t4_forward(None, None, {'query_context_states': [states3]}, w3)['t4_output']
    out3 = jax.block_until_ready(out3)
    ref3 = jnp.sum(states3[:, :, 0, :] * w3[0], axis=-1)
    assert out3.shape == (2, 300)
    assert jnp.allclose(out3, ref3, atol=TOL, rtol=TOL)

    print("KERNEL_OK")
</pallas_src>

<mosaic_0001>
module attributes {stable_mosaic.version = 11 : i64} {
  func.func @kernel(%arg0: i32, %arg1: memref<16x128xf32, #tpu.memory_space<vmem>>, %arg2: memref<1x128xf32, #tpu.memory_space<vmem>>, %arg3: memref<1x16xf32, #tpu.memory_space<vmem>>) attributes {dimension_semantics = [#tpu.dimension_semantics<parallel>], iteration_bounds = array<i64: 1>, scalar_prefetch = 0 : i64, scratch_operands = 0 : i64, tpu.core_type = #tpu.core_type<tc>, window_params = [{transform_indices = @transform_0, window_bounds = array<i64: 16, 128>}, {pipeline_mode = #tpu.pipeline_mode<synchronous>, transform_indices = @transform_1, window_bounds = array<i64: 1, 128>}, {transform_indices = @transform_2, window_bounds = array<i64: 1, 16>}]} {
    %c0 = arith.constant 0 : index
    %c0_0 = arith.constant 0 : index
    %0 = vector.load %arg2[%c0, %c0_0] : memref<1x128xf32, #tpu.memory_space<vmem>>, vector<1x128xf32>
    %c0_1 = arith.constant 0 : index
    %c0_2 = arith.constant 0 : index
    %1 = vector.load %arg1[%c0_1, %c0_2] : memref<16x128xf32, #tpu.memory_space<vmem>>, vector<16x128xf32>
    %cst = arith.constant dense<0.000000e+00> : vector<1x16xf32>
    %2 = tpu.matmul %0, %1, %cst {dimension_numbers = #tpu.dot_dimension_numbers<[1], [1], [0], [0], [0, 0, 1, 0], [], []>, precision = #tpu.contract_precision<fp32>} : vector<1x128xf32>, vector<16x128xf32>, vector<1x16xf32> -> vector<1x16xf32>
    %c0_3 = arith.constant 0 : index
    %c0_4 = arith.constant 0 : index
    %3 = vector.load %arg3[%c0_3, %c0_4] : memref<1x16xf32, #tpu.memory_space<vmem>>, vector<1x16xf32>
    tpu.vector_store %arg3[%c0_3, %c0_4], %2 {strides = array<i32>} : memref<1x16xf32, #tpu.memory_space<vmem>>, vector<1x16xf32>,
    return
  }
  func.func @transform_0(%arg0: i32) -> (i32, i32) {
    %c0_i32 = arith.constant 0 : i32
    %c0_i32_0 = arith.constant 0 : i32
    return %arg0, %c0_i32 : i32, i32
  }
  func.func @transform_1(%arg0: i32) -> (i32, i32) {
    %c0_i32 = arith.constant 0 : i32
    %c0_i32_0 = arith.constant 0 : i32
    %c0_i32_1 = arith.constant 0 : i32
    return %c0_i32, %c0_i32_0 : i32, i32
  }
  func.func @transform_2(%arg0: i32) -> (i32, i32) {
    %c0_i32 = arith.constant 0 : i32
    %c0_i32_0 = arith.constant 0 : i32
    return %c0_i32, %arg0 : i32, i32
  }
}

</mosaic_0001>

<llo_original>
// kernel: tpu_custom_call.1
$region0: #{tpu_custom_call.1}
  #allocation0 [shape = 'u32[]', space=smem, size = 0x4, offset = 0x4, fixed_abs, tag = 'smem constant byte address 0x4 - core index']
  #allocation1 [shape = 'u32[144,128]{1,0:T(1,128)}', space=vmem, size = 0x12000, scoped, tag = 'internal scratch']
  %s0 = inlined_call_operand.hbm [shape: f32[16,128], index: 0, kind: input, shape index: {}]
  %s1 = inlined_call_operand.vmem [shape: f32[1,128], index: 1, kind: input, shape index: {}]
  %s2 = inlined_call_operand.hbm [shape: f32[1,16], index: 2, kind: output, shape index: {}]
  %s3 = sld [smem:[#allocation0]]
  $region22: #{tpu_custom_call.1} parent=0
    _
  %s5 = ssub.s32 1, %s3
  %s6 = scalar_select 0, %s5, %s3
  $region1: #{tpu_custom_call.1} parent=0
    #allocation2 [shape = 'u8[8192]{0}', space=vmem, size = 0x2000, scoped, tag = 'input window, operand 0, single buffered']
    #allocation3 [shape = 's32[1]{0}', space=sflag, size = 0x4, scoped, tag = 'scoped memory for tpu_custom_call.1']
    #allocation4 [shape = 's32[1]{0}', space=sflag, size = 0x4, scoped, tag = 'scoped memory for tpu_custom_call.1']
    #allocation5 [shape = 'u8[512]{0}', space=vmem, size = 0x400, scoped, tag = 'output window, operand 0, single buffered']
    %7 = vsyncpa [#allocation3], 0
    %8 = vsyncpa [#allocation4], 0
    // Predicated region
    $region2: #{tpu_custom_call.1} parent=1 // pred_check
      _
    $region3: #{tpu_custom_call.1} parent=1 // pred_check_branch
      %10 = sbr.rel (0) target = $region5
    $region4: #{tpu_custom_call.1} parent=1 // pred_region
      %s12 = ssub.s32 256, 256
      %13 = vsyncadd [#allocation3], %s12
      %s14 = sshll.u32 [#allocation2], 4
      %s15 = int_to_ptr.vmem [resolvable:$true] %s14
      %20 = dma.hbm_to_vmem [thread:$0]  %s0, 256, %s15, [#allocation3], 128, 128, 8
    $region5: #{tpu_custom_call.1} parent=1 // pred_fallthru
      _
    // Predicated region
    $region6: #{tpu_custom_call.1} parent=1 // pred_check
      _
    $region7: #{tpu_custom_call.1} parent=1 // pred_check_branch
      %22 = sbr.rel (0) target = $region9
    $region8: #{tpu_custom_call.1} parent=1 // pred_region
      _
    $region9: #{tpu_custom_call.1} parent=1 // pred_fallthru
      _
    // Predicated region
    $region10: #{tpu_custom_call.1} parent=1 // pred_check
      _
    $region11: #{tpu_custom_call.1} parent=1 // pred_check_branch
      %24 = sbr.rel (0) target = $region13
    $region12: #{tpu_custom_call.1} parent=1 // pred_region
      %25 = dma.done [#allocation3], 256
    $region13: #{tpu_custom_call.1} parent=1 // pred_fallthru
      _
    %v26 = vld [vmem:[%s1] sm:$0x1]
    %v27 = vld [vmem:[#allocation2] sm:$0xff]
    %v28 = vld [vmem:[#allocation2 + $0x8] sm:$0xff]
    %29 = vmatprep.subr.mxu0 0.0
    %v30 = vand.u32 %v27, 4294901760
    %31 = vmatpush1.xpose.msra.mxu0 %v30
    %32 = vmatprep.subr.mxu0 0.0
    %v33 = vand.u32 %v28, 4294901760
    %34 = vmatpush1.xpose.msra.mxu0 %v33
    %35 = vmatprep.subr.mxu0 0.0
    %36 = vmatpush1.xpose.msra.mxu0 0.0
    %37 = vmatprep.subr.mxu0 0.0
    %38 = vmatpush1.xpose.msra.mxu0 0.0
    %39 = vmatprep.subr.mxu0 0.0
    %40 = vmatpush1.xpose.msra.mxu0 0.0
    %41 = vmatprep.subr.mxu0 0.0
    %42 = vmatpush1.xpose.msra.mxu0 0.0
    %43 = vmatprep.subr.mxu0 0.0
    %44 = vmatpush1.xpose.msra.mxu0 0.0
    %45 = vmatprep.subr.mxu0 0.0
    %46 = vmatpush1.xpose.msra.mxu0 0.0
    %47 = vmatprep.subr.mxu0 0.0
    %48 = vmatpush1.xpose.msra.mxu0 0.0
    %49 = vmatprep.subr.mxu0 0.0
    %50 = vmatpush1.xpose.msra.mxu0 0.0
    %51 = vmatprep.subr.mxu0 0.0
    %52 = vmatpush1.xpose.msra.mxu0 0.0
    %53 = vmatprep.subr.mxu0 0.0
    %54 = vmatpush1.xpose.msra.mxu0 0.0
    %55 = vmatprep.subr.mxu0 0.0
    %56 = vmatpush1.xpose.msra.mxu0 0.0
    %57 = vmatprep.subr.mxu0 0.0
    %58 = vmatpush1.xpose.msra.mxu0 0.0
    %59 = vmatprep.subr.mxu0 0.0
    %60 = vmatpush1.xpose.msra.mxu0 0.0
    %61 = vmatprep.subr.mxu0 0.0
    %62 = vmatpush1.xpose.msra.mxu0 0.0
    %63 = vmatprep.subr.mxu0 0.0
    %64 = vmatpush1.xpose.msra.mxu0 0.0
    %65 = vmatprep.subr.mxu0 0.0
    %66 = vmatpush1.xpose.msra.mxu0 0.0
    %67 = vmatprep.subr.mxu0 0.0
    %68 = vmatpush1.xpose.msra.mxu0 0.0
    %69 = vmatprep.subr.mxu0 0.0
    %70 = vmatpush1.xpose.msra.mxu0 0.0
    %71 = vmatprep.subr.mxu0 0.0
    %72 = vmatpush1.xpose.msra.mxu0 0.0
    %73 = vmatprep.subr.mxu0 0.0
    %74 = vmatpush1.xpose.msra.mxu0 0.0
    %75 = vmatprep.subr.mxu0 0.0
    %76 = vmatpush1.xpose.msra.mxu0 0.0
    %77 = vmatprep.subr.mxu0 0.0
    %78 = vmatpush1.xpose.msra.mxu0 0.0
    %79 = vmatprep.subr.mxu0 0.0
    %80 = vmatpush1.xpose.msra.mxu0 0.0
    %81 = vmatprep.subr.mxu0 0.0
    %82 = vmatpush1.xpose.msra.mxu0 0.0
    %83 = vmatprep.subr.mxu0 0.0
    %84 = vmatpush1.xpose.msra.mxu0 0.0
    %85 = vmatprep.subr.mxu0 0.0
    %86 = vmatpush1.xpose.msra.mxu0 0.0
    %87 = vmatprep.subr.mxu0 0.0
    %88 = vmatpush1.xpose.msra.mxu0 0.0
    %89 = vmatprep.subr.mxu0 0.0
    %90 = vmatpush1.xpose.msra.mxu0 0.0
    %91 = vmatprep.subr.mxu0 0.0
    %92 = vmatpush1.xpose.msra.mxu0 0.0
    %93 = vmatprep.subr.mxu0 0.0
    %94 = vmatpush1.xpose.msra.mxu0 0.0
    %95 = vmatprep.mubr.f32.mxu0 0.0
    %v96 = vand.u32 %v26, 4294901760
    %v97 = vsub.f32 %v26, %v96
    %v98 = vand.u32 %v97, 4294901760
    %v99 = vsub.f32 %v97, %v98
    %v100 = vand.u32 %v99, 4294901760
    %101 = vmatmul.mubr.f32.gmra.mrb[0].mxu0 %v100
    %v102 = vpop.f32.mrb[0].mxu0
    %v103 = vadd.f32 0.0, %v102
    %v104 = vpop.f32.mrb[0].mxu0
    %105 = vdwg.mxu0
    %106 = vmatprep.subr.mxu0 0.0
    %v107 = vand.u32 %v27, 4294901760
    %v108 = vsub.f32 %v27, %v107
    %v109 = vand.u32 %v108, 4294901760
    %v110 = vsub.f32 %v108, %v109
    %v111 = vand.u32 %v110, 4294901760
    %112 = vmatpush1.xpose.msra.mxu0 %v111
    %113 = vmatprep.subr.mxu0 0.0
    %v114 = vand.u32 %v28, 4294901760
    %v115 = vsub.f32 %v28, %v114
    %v116 = vand.u32 %v115, 4294901760
    %v117 = vsub.f32 %v115, %v116
    %v118 = vand.u32 %v117, 4294901760
    %119 = vmatpush1.xpose.msra.mxu0 %v118
    %120 = vmatprep.subr.mxu0 0.0
    %121 = vmatpush1.xpose.msra.mxu0 0.0
    %122 = vmatprep.subr.mxu0 0.0
    %123 = vmatpush1.xpose.msra.mxu0 0.0
    %124 = vmatprep.subr.mxu0 0.0
    %125 = vmatpush1.xpose.msra.mxu0 0.0
    %126 = vmatprep.subr.mxu0 0.0
    %127 = vmatpush1.xpose.msra.mxu0 0.0
    %128 = vmatprep.subr.mxu0 0.0
    %129 = vmatpush1.xpose.msra.mxu0 0.0
    %130 = vmatprep.subr.mxu0 0.0
    %131 = vmatpush1.xpose.msra.mxu0 0.0
    %132 = vmatprep.subr.mxu0 0.0
    %133 = vmatpush1.xpose.msra.mxu0 0.0
    %134 = vmatprep.subr.mxu0 0.0
    %135 = vmatpush1.xpose.msra.mxu0 0.0
    %136 = vmatprep.subr.mxu0 0.0
    %137 = vmatpush1.xpose.msra.mxu0 0.0
    %138 = vmatprep.subr.mxu0 0.0
    %139 = vmatpush1.xpose.msra.mxu0 0.0
    %140 = vmatprep.subr.mxu0 0.0
    %141 = vmatpush1.xpose.msra.mxu0 0.0
    %142 = vmatprep.subr.mxu0 0.0
    %143 = vmatpush1.xpose.msra.mxu0 0.0
    %144 = vmatprep.subr.mxu0 0.0
    %145 = vmatpush1.xpose.msra.mxu0 0.0
    %146 = vmatprep.subr.mxu0 0.0
    %147 = vmatpush1.xpose.msra.mxu0 0.0
    %148 = vmatprep.subr.mxu0 0.0
    %149 = vmatpush1.xpose.msra.mxu0 0.0
    %150 = vmatprep.subr.mxu0 0.0
    %151 = vmatpush1.xpose.msra.mxu0 0.0
    %152 = vmatprep.subr.mxu0 0.0
    %153 = vmatpush1.xpose.msra.mxu0 0.0
    %154 = vmatprep.subr.mxu0 0.0
    %155 = vmatpush1.xpose.msra.mxu0 0.0
    %156 = vmatprep.subr.mxu0 0.0
    %157 = vmatpush1.xpose.msra.mxu0 0.0
    %158 = vmatprep.subr.mxu0 0.0
    %159 = vmatpush1.xpose.msra.mxu0 0.0
    %160 = vmatprep.subr.mxu0 0.0
    %161 = vmatpush1.xpose.msra.mxu0 0.0
    %162 = vmatprep.subr.mxu0 0.0
    %163 = vmatpush1.xpose.msra.mxu0 0.0
    %164 = vmatprep.subr.mxu0 0.0
    %165 = vmatpush1.xpose.msra.mxu0 0.0
    %166 = vmatprep.subr.mxu0 0.0
    %167 = vmatpush1.xpose.msra.mxu0 0.0
    %168 = vmatprep.subr.mxu0 0.0
    %169 = vmatpush1.xpose.msra.mxu0 0.0
    %170 = vmatprep.subr.mxu0 0.0
    %171 = vmatpush1.xpose.msra.mxu0 0.0
    %172 = vmatprep.subr.mxu0 0.0
    %173 = vmatpush1.xpose.msra.mxu0 0.0
    %174 = vmatprep.subr.mxu0 0.0
    %175 = vmatpush1.xpose.msra.mxu0 0.0
    %176 = vmatprep.subr.mxu0 0.0
    %177 = vmatpush1.xpose.msra.mxu0 0.0
    %178 = vmatprep.subr.mxu0 0.0
    %179 = vmatpush1.xpose.msra.mxu0 0.0
    %180 = vmatprep.mubr.f32.mxu0 0.0
    %v181 = vand.u32 %v26, 4294901760
    %182 = vmatmul.mubr.f32.gmra.mrb[0].mxu0 %v181
    %v183 = vpop.f32.mrb[0].mxu0
    %v184 = vadd.f32 %v103, %v183
    %v185 = vpop.f32.mrb[0].mxu0
    %186 = vdwg.mxu0
    %187 = vmatprep.subr.mxu0 0.0
    %v188 = vand.u32 %v27, 4294901760
    %v189 = vsub.f32 %v27, %v188
    %190 = vmatpush1.xpose.msra.mxu0 %v189
    %191 = vmatprep.subr.mxu0 0.0
    %v192 = vand.u32 %v28, 4294901760
    %v193 = vsub.f32 %v28, %v192
    %194 = vmatpush1.xpose.msra.mxu0 %v193
    %195 = vmatprep.subr.mxu0 0.0
    %196 = vmatpush1.xpose.msra.mxu0 0.0
    %197 = vmatprep.subr.mxu0 0.0
    %198 = vmatpush1.xpose.msra.mxu0 0.0
    %199 = vmatprep.subr.mxu0 0.0
    %200 = vmatpush1.xpose.msra.mxu0 0.0
    %201 = vmatprep.subr.mxu0 0.0
    %202 = vmatpush1.xpose.msra.mxu0 0.0
    %203 = vmatprep.subr.mxu0 0.0
    %204 = vmatpush1.xpose.msra.mxu0 0.0
    %205 = vmatprep.subr.mxu0 0.0
    %206 = vmatpush1.xpose.msra.mxu0 0.0
    %207 = vmatprep.subr.mxu0 0.0
    %208 = vmatpush1.xpose.msra.mxu0 0.0
    %209 = vmatprep.subr.mxu0 0.0
    %210 = vmatpush1.xpose.msra.mxu0 0.0
    %211 = vmatprep.subr.mxu0 0.0
    %212 = vmatpush1.xpose.msra.mxu0 0.0
    %213 = vmatprep.subr.mxu0 0.0
    %214 = vmatpush1.xpose.msra.mxu0 0.0
    %215 = vmatprep.subr.mxu0 0.0
    %216 = vmatpush1.xpose.msra.mxu0 0.0
    %217 = vmatprep.subr.mxu0 0.0
    %218 = vmatpush1.xpose.msra.mxu0 0.0
    %219 = vmatprep.subr.mxu0 0.0
    %220 = vmatpush1.xpose.msra.mxu0 0.0
    %221 = vmatprep.subr.mxu0 0.0
    %222 = vmatpush1.xpose.msra.mxu0 0.0
    %223 = vmatprep.subr.mxu0 0.0
    %224 = vmatpush1.xpose.msra.mxu0 0.0
    %225 = vmatprep.subr.mxu0 0.0
    %226 = vmatpush1.xpose.msra.mxu0 0.0
    %227 = vmatprep.subr.mxu0 0.0
    %228 = vmatpush1.xpose.msra.mxu0 0.0
    %229 = vmatprep.subr.mxu0 0.0
    %230 = vmatpush1.xpose.msra.mxu0 0.0
    %231 = vmatprep.subr.mxu0 0.0
    %232 = vmatpush1.xpose.msra.mxu0 0.0
    %233 = vmatprep.subr.mxu0 0.0
    %234 = vmatpush1.xpose.msra.mxu0 0.0
    %235 = vmatprep.subr.mxu0 0.0
    %236 = vmatpush1.xpose.msra.mxu0 0.0
    %237 = vmatprep.subr.mxu0 0.0
    %238 = vmatpush1.xpose.msra.mxu0 0.0
    %239 = vmatprep.subr.mxu0 0.0
    %240 = vmatpush1.xpose.msra.mxu0 0.0
    %241 = vmatprep.subr.mxu0 0.0
    %242 = vmatpush1.xpose.msra.mxu0 0.0
    %243 = vmatprep.subr.mxu0 0.0
    %244 = vmatpush1.xpose.msra.mxu0 0.0
    %245 = vmatprep.subr.mxu0 0.0
    %246 = vmatpush1.xpose.msra.mxu0 0.0
    %247 = vmatprep.subr.mxu0 0.0
    %248 = vmatpush1.xpose.msra.mxu0 0.0
    %249 = vmatprep.subr.mxu0 0.0
    %250 = vmatpush1.xpose.msra.mxu0 0.0
    %251 = vmatprep.subr.mxu0 0.0
    %252 = vmatpush1.xpose.msra.mxu0 0.0
    %253 = vmatprep.subr.mxu0 0.0
    %254 = vmatpush1.xpose.msra.mxu0 0.0
    %255 = vmatprep.mubr.f32.mxu0 0.0
    %v256 = vand.u32 %v26, 4294901760
    %v257 = vsub.f32 %v26, %v256
    %258 = vmatmul.mubr.f32.gmra.mrb[0].mxu0 %v257
    %v259 = vpop.f32.mrb[0].mxu0
    %v260 = vadd.f32 %v184, %v259
    %v261 = vpop.f32.mrb[0].mxu0
    %262 = vdwg.mxu0
    %263 = vmatprep.subr.mxu0 0.0
    %v264 = vand.u32 %v27, 4294901760
    %265 = vmatpush1.xpose.msra.mxu0 %v264
    %266 = vmatprep.subr.mxu0 0.0
    %v267 = vand.u32 %v28, 4294901760
    %268 = vmatpush1.xpose.msra.mxu0 %v267
    %269 = vmatprep.subr.mxu0 0.0
    %270 = vmatpush1.xpose.msra.mxu0 0.0
    %271 = vmatprep.subr.mxu0 0.0
    %272 = vmatpush1.xpose.msra.mxu0 0.0
    %273 = vmatprep.subr.mxu0 0.0
    %274 = vmatpush1.xpose.msra.mxu0 0.0
    %275 = vmatprep.subr.mxu0 0.0
    %276 = vmatpush1.xpose.msra.mxu0 0.0
    %277 = vmatprep.subr.mxu0 0.0
    %278 = vmatpush1.xpose.msra.mxu0 0.0
    %279 = vmatprep.subr.mxu0 0.0
    %280 = vmatpush1.xpose.msra.mxu0 0.0
    %281 = vmatprep.subr.mxu0 0.0
    %282 = vmatpush1.xpose.msra.mxu0 0.0
    %283 = vmatprep.subr.mxu0 0.0
    %284 = vmatpush1.xpose.msra.mxu0 0.0
    %285 = vmatprep.subr.mxu0 0.0
    %286 = vmatpush1.xpose.msra.mxu0 0.0
    %287 = vmatprep.subr.mxu0 0.0
    %288 = vmatpush1.xpose.msra.mxu0 0.0
    %289 = vmatprep.subr.mxu0 0.0
    %290 = vmatpush1.xpose.msra.mxu0 0.0
    %291 = vmatprep.subr.mxu0 0.0
    %292 = vmatpush1.xpose.msra.mxu0 0.0
    %293 = vmatprep.subr.mxu0 0.0
    %294 = vmatpush1.xpose.msra.mxu0 0.0
    %295 = vmatprep.subr.mxu0 0.0
    %296 = vmatpush1.xpose.msra.mxu0 0.0
    %297 = vmatprep.subr.mxu0 0.0
    %298 = vmatpush1.xpose.msra.mxu0 0.0
    %299 = vmatprep.subr.mxu0 0.0
    %300 = vmatpush1.xpose.msra.mxu0 0.0
    %301 = vmatprep.subr.mxu0 0.0
    %302 = vmatpush1.xpose.msra.mxu0 0.0
    %303 = vmatprep.subr.mxu0 0.0
    %304 = vmatpush1.xpose.msra.mxu0 0.0
    %305 = vmatprep.subr.mxu0 0.0
    %306 = vmatpush1.xpose.msra.mxu0 0.0
    %307 = vmatprep.subr.mxu0 0.0
    %308 = vmatpush1.xpose.msra.mxu0 0.0
    %309 = vmatprep.subr.mxu0 0.0
    %310 = vmatpush1.xpose.msra.mxu0 0.0
    %311 = vmatprep.subr.mxu0 0.0
    %312 = vmatpush1.xpose.msra.mxu0 0.0
    %313 = vmatprep.subr.mxu0 0.0
    %314 = vmatpush1.xpose.msra.mxu0 0.0
    %315 = vmatprep.subr.mxu0 0.0
    %316 = vmatpush1.xpose.msra.mxu0 0.0
    %317 = vmatprep.subr.mxu0 0.0
    %318 = vmatpush1.xpose.msra.mxu0 0.0
    %319 = vmatprep.subr.mxu0 0.0
    %320 = vmatpush1.xpose.msra.mxu0 0.0
    %321 = vmatprep.subr.mxu0 0.0
    %322 = vmatpush1.xpose.msra.mxu0 0.0
    %323 = vmatprep.subr.mxu0 0.0
    %324 = vmatpush1.xpose.msra.mxu0 0.0
    %325 = vmatprep.subr.mxu0 0.0
    %326 = vmatpush1.xpose.msra.mxu0 0.0
    %327 = vmatprep.subr.mxu0 0.0
    %328 = vmatpush1.xpose.msra.mxu0 0.0
    %329 = vmatprep.mubr.f32.mxu0 0.0
    %v330 = vand.u32 %v26, 4294901760
    %v331 = vsub.f32 %v26, %v330
    %v332 = vand.u32 %v331, 4294901760
    %333 = vmatmul.mubr.f32.gmra.mrb[0].mxu0 %v332
    %v334 = vpop.f32.mrb[0].mxu0
    %v335 = vadd.f32 %v260, %v334
    %v336 = vpop.f32.mrb[0].mxu0
    %337 = vdwg.mxu0
    %338 = vmatprep.subr.mxu0 0.0
    %v339 = vand.u32 %v27, 4294901760
    %v340 = vsub.f32 %v27, %v339
    %v341 = vand.u32 %v340, 4294901760
    %342 = vmatpush1.xpose.msra.mxu0 %v341
    %343 = vmatprep.subr.mxu0 0.0
    %v344 = vand.u32 %v28, 4294901760
    %v345 = vsub.f32 %v28, %v344
    %v346 = vand.u32 %v345, 4294901760
    %347 = vmatpush1.xpose.msra.mxu0 %v346
    %348 = vmatprep.subr.mxu0 0.0
    %349 = vmatpush1.xpose.msra.mxu0 0.0
    %350 = vmatprep.subr.mxu0 0.0
    %351 = vmatpush1.xpose.msra.mxu0 0.0
    %352 = vmatprep.subr.mxu0 0.0
    %353 = vmatpush1.xpose.msra.mxu0 0.0
    %354 = vmatprep.subr.mxu0 0.0
    %355 = vmatpush1.xpose.msra.mxu0 0.0
    %356 = vmatprep.subr.mxu0 0.0
    %357 = vmatpush1.xpose.msra.mxu0 0.0
    %358 = vmatprep.subr.mxu0 0.0
    %359 = vmatpush1.xpose.msra.mxu0 0.0
    %360 = vmatprep.subr.mxu0 0.0
    %361 = vmatpush1.xpose.msra.mxu0 0.0
    %362 = vmatprep.subr.mxu0 0.0
    %363 = vmatpush1.xpose.msra.mxu0 0.0
    %364 = vmatprep.subr.mxu0 0.0
    %365 = vmatpush1.xpose.msra.mxu0 0.0
    %366 = vmatprep.subr.mxu0 0.0
    %367 = vmatpush1.xpose.msra.mxu0 0.0
    %368 = vmatprep.subr.mxu0 0.0
    %369 = vmatpush1.xpose.msra.mxu0 0.0
    %370 = vmatprep.subr.mxu0 0.0
    %371 = vmatpush1.xpose.msra.mxu0 0.0
    %372 = vmatprep.subr.mxu0 0.0
    %373 = vmatpush1.xpose.msra.mxu0 0.0
    %374 = vmatprep.subr.mxu0 0.0
    %375 = vmatpush1.xpose.msra.mxu0 0.0
    %376 = vmatprep.subr.mxu0 0.0
    %377 = vmatpush1.xpose.msra.mxu0 0.0
    %378 = vmatprep.subr.mxu0 0.0
    %379 = vmatpush1.xpose.msra.mxu0 0.0
    %380 = vmatprep.subr.mxu0 0.0
    %381 = vmatpush1.xpose.msra.mxu0 0.0
    %382 = vmatprep.subr.mxu0 0.0
    %383 = vmatpush1.xpose.msra.mxu0 0.0
    %384 = vmatprep.subr.mxu0 0.0
    %385 = vmatpush1.xpose.msra.mxu0 0.0
    %386 = vmatprep.subr.mxu0 0.0
    %387 = vmatpush1.xpose.msra.mxu0 0.0
    %388 = vmatprep.subr.mxu0 0.0
    %389 = vmatpush1.xpose.msra.mxu0 0.0
    %390 = vmatprep.subr.mxu0 0.0
    %391 = vmatpush1.xpose.msra.mxu0 0.0
    %392 = vmatprep.subr.mxu0 0.0
    %393 = vmatpush1.xpose.msra.mxu0 0.0
    %394 = vmatprep.subr.mxu0 0.0
    %395 = vmatpush1.xpose.msra.mxu0 0.0
    %396 = vmatprep.subr.mxu0 0.0
    %397 = vmatpush1.xpose.msra.mxu0 0.0
    %398 = vmatprep.subr.mxu0 0.0
    %399 = vmatpush1.xpose.msra.mxu0 0.0
    %400 = vmatprep.subr.mxu0 0.0
    %401 = vmatpush1.xpose.msra.mxu0 0.0
    %402 = vmatprep.subr.mxu0 0.0
    %403 = vmatpush1.xpose.msra.mxu0 0.0
    %404 = vmatprep.subr.mxu0 0.0
    %405 = vmatpush1.xpose.msra.mxu0 0.0
    %406 = vmatprep.subr.mxu0 0.0
    %407 = vmatpush1.xpose.msra.mxu0 0.0
    %408 = vmatprep.mubr.f32.mxu0 0.0
    %v409 = vand.u32 %v26, 4294901760
    %410 = vmatmul.mubr.f32.gmra.mrb[0].mxu0 %v409
    %v411 = vpop.f32.mrb[0].mxu0
    %v412 = vadd.f32 %v335, %v411
    %v413 = vpop.f32.mrb[0].mxu0
    %414 = vdwg.mxu0
    %415 = vmatprep.subr.mxu0 0.0
    %v416 = vand.u32 %v27, 4294901760
    %417 = vmatpush1.xpose.msra.mxu0 %v416
    %418 = vmatprep.subr.mxu0 0.0
    %v419 = vand.u32 %v28, 4294901760
    %420 = vmatpush1.xpose.msra.mxu0 %v419
    %421 = vmatprep.subr.mxu0 0.0
    %422 = vmatpush1.xpose.msra.mxu0 0.0
    %423 = vmatprep.subr.mxu0 0.0
    %424 = vmatpush1.xpose.msra.mxu0 0.0
    %425 = vmatprep.subr.mxu0 0.0
    %426 = vmatpush1.xpose.msra.mxu0 0.0
    %427 = vmatprep.subr.mxu0 0.0
    %428 = vmatpush1.xpose.msra.mxu0 0.0
    %429 = vmatprep.subr.mxu0 0.0
    %430 = vmatpush1.xpose.msra.mxu0 0.0
    %431 = vmatprep.subr.mxu0 0.0
    %432 = vmatpush1.xpose.msra.mxu0 0.0
    %433 = vmatprep.subr.mxu0 0.0
    %434 = vmatpush1.xpose.msra.mxu0 0.0
    %435 = vmatprep.subr.mxu0 0.0
    %436 = vmatpush1.xpose.msra.mxu0 0.0
    %437 = vmatprep.subr.mxu0 0.0
    %438 = vmatpush1.xpose.msra.mxu0 0.0
    %439 = vmatprep.subr.mxu0 0.0
    %440 = vmatpush1.xpose.msra.mxu0 0.0
    %441 = vmatprep.subr.mxu0 0.0
    %442 = vmatpush1.xpose.msra.mxu0 0.0
    %443 = vmatprep.subr.mxu0 0.0
    %444 = vmatpush1.xpose.msra.mxu0 0.0
    %445 = vmatprep.subr.mxu0 0.0
    %446 = vmatpush1.xpose.msra.mxu0 0.0
    %447 = vmatprep.subr.mxu0 0.0
    %448 = vmatpush1.xpose.msra.mxu0 0.0
    %449 = vmatprep.subr.mxu0 0.0
    %450 = vmatpush1.xpose.msra.mxu0 0.0
    %451 = vmatprep.subr.mxu0 0.0
    %452 = vmatpush1.xpose.msra.mxu0 0.0
    %453 = vmatprep.subr.mxu0 0.0
    %454 = vmatpush1.xpose.msra.mxu0 0.0
    %455 = vmatprep.subr.mxu0 0.0
    %456 = vmatpush1.xpose.msra.mxu0 0.0
    %457 = vmatprep.subr.mxu0 0.0
    %458 = vmatpush1.xpose.msra.mxu0 0.0
    %459 = vmatprep.subr.mxu0 0.0
    %460 = vmatpush1.xpose.msra.mxu0 0.0
    %461 = vmatprep.subr.mxu0 0.0
    %462 = vmatpush1.xpose.msra.mxu0 0.0
    %463 = vmatprep.subr.mxu0 0.0
    %464 = vmatpush1.xpose.msra.mxu0 0.0
    %465 = vmatprep.subr.mxu0 0.0
    %466 = vmatpush1.xpose.msra.mxu0 0.0
    %467 = vmatprep.subr.mxu0 0.0
    %468 = vmatpush1.xpose.msra.mxu0 0.0
    %469 = vmatprep.subr.mxu0 0.0
    %470 = vmatpush1.xpose.msra.mxu0 0.0
    %471 = vmatprep.subr.mxu0 0.0
    %472 = vmatpush1.xpose.msra.mxu0 0.0
    %473 = vmatprep.subr.mxu0 0.0
    %474 = vmatpush1.xpose.msra.mxu0 0.0
    %475 = vmatprep.subr.mxu0 0.0
    %476 = vmatpush1.xpose.msra.mxu0 0.0
    %477 = vmatprep.subr.mxu0 0.0
    %478 = vmatpush1.xpose.msra.mxu0 0.0
    %479 = vmatprep.subr.mxu0 0.0
    %480 = vmatpush1.xpose.msra.mxu0 0.0
    %481 = vmatprep.mubr.f32.mxu0 0.0
    %v482 = vand.u32 %v26, 4294901760
    %483 = vmatmul.mubr.f32.gmra.mrb[0].mxu0 %v482
    %v484 = vpop.f32.mrb[0].mxu0
    %v485 = vadd.f32 %v412, %v484
    %v486 = vpop.f32.mrb[0].mxu0
    %487 = vdwg.mxu0
    %vm488 = vcmask 122880
    %489 = vst.msk [vmem:[#allocation5] sm:$0x1] %vm488, %v485
    // Predicated region
    $region14: #{tpu_custom_call.1} parent=1 // pred_check
      _
    $region15: #{tpu_custom_call.1} parent=1 // pred_check_branch
      %491 = sbr.rel (0) target = $region17
    $region16: #{tpu_custom_call.1} parent=1 // pred_region
      %s493 = ssub.s32 16, 16
      %494 = vsyncadd [#allocation4], %s493
      %s496 = sshll.u32 [#allocation5], 4
      %s497 = int_to_ptr.vmem [resolvable:$true] %s496
      %499 = dma.vmem_to_hbm [thread:$0]  %s497, 16, %s2, [#allocation4]
    $region17: #{tpu_custom_call.1} parent=1 // pred_fallthru
      _
    // Predicated region
    $region18: #{tpu_custom_call.1} parent=1 // pred_check
      _
    $region19: #{tpu_custom_call.1} parent=1 // pred_check_branch
      %501 = sbr.rel (0) target = $region21
    $region20: #{tpu_custom_call.1} parent=1 // pred_region
      %502 = dma.done [#allocation4], 16
    $region21: #{tpu_custom_call.1} parent=1 // pred_fallthru
      _
    %503 = vsyncpa [#allocation3], 1
    %504 = vsyncpa [#allocation4], 1

</llo_original>
